<compile_context>
chip_gen: v5e
topology: v5e:2x2
jax: 0.10.0
libtpu: 0.0.40
codegen_flags: <defaults>
</compile_context>

<pallas_src>
import jax
import jax.numpy as jnp
from jax import lax
from jax.experimental import pallas as pl
from jax.experimental.pallas import tpu as pltpu


def _rope_kernel(pos_ref, p0_ref, contig_ref, x_ref, cos_tab_ref, sin_tab_ref,
                 o_ref, cos_sc, sin_sc):
    # pos_ref:     [B*S] int32 in SMEM (scalar prefetch)
    # p0_ref:      [B*n_s] int32 first position of each (b, seq-tile)
    # contig_ref:  [B*n_s] int32 1 if the tile's positions are p0, p0+1, ...
    # x_ref/o_ref: (1, th, ts, D) VMEM block
    # cos_tab_ref: (max_pos, D) VMEM-resident table (single buffer)
    # sin_tab_ref: (max_pos, D) VMEM-resident table, first D/2 lanes pre-negated
    # cos_sc/sin_sc: (ts, D) VMEM scratch for the gathered per-token rows
    b = pl.program_id(0)
    si = pl.program_id(2)
    n_s = pl.num_programs(2)
    ts = cos_sc.shape[0]

    t_idx = b * n_s + si
    p0 = p0_ref[t_idx]
    cg = contig_ref[t_idx]

    @pl.when(cg == 1)
    def _():
        # Contiguous positions: one bulk sublane copy per table.
        cos_sc[...] = cos_tab_ref[pl.ds(p0, ts), :]
        sin_sc[...] = sin_tab_ref[pl.ds(p0, ts), :]

    @pl.when(cg == 0)
    def _():
        base = t_idx * ts  # == b * S + si * ts

        def gather(i, carry):
            p = pos_ref[base + i]
            cos_sc[pl.ds(i, 1), :] = cos_tab_ref[pl.ds(p, 1), :]
            sin_sc[pl.ds(i, 1), :] = sin_tab_ref[pl.ds(p, 1), :]
            return carry

        lax.fori_loop(0, ts, gather, 0, unroll=8)

    x = x_ref[0]            # (th, ts, D)
    cos = cos_sc[...]       # (ts, D)
    sin = sin_sc[...]       # (ts, D), rotate_half sign already baked in

    half = x.shape[-1] // 2
    # roll by D/2 along lanes -> concat(x2, x1) (direction irrelevant for D/2).
    rolled = pltpu.roll(x, shift=half, axis=x.ndim - 1)
    out = x * cos[None, :, :] + rolled * sin[None, :, :]
    o_ref[0] = out.astype(o_ref.dtype)


def _vmem_capacity_bytes():
    try:
        info = pltpu.get_tpu_info()
        cap = getattr(info, "vmem_capacity_bytes", None)
        if cap:
            return int(cap)
    except Exception:
        pass
    return 64 << 20  # conservative: v7x per-TC VMEM


def _choose_tiling(B, H, S, D, itemsize, vmem_cap_bytes):
    """Pick (head_tile, seq_tile): big lane/sublane-aligned blocks that fit VMEM."""
    # sublane packing multiple for the second-minor dim
    sub = 8 if itemsize >= 4 else (16 if itemsize == 2 else 32)
    # x block budget: in + out, double-buffered -> ~4x block; use ~1/16 of VMEM,
    # capped at 12 MiB (big on v5e/v6e, re-derived smaller on v7x's 64 MiB).
    target = max(min(vmem_cap_bytes // 16, 12 << 20), 512 << 10)

    ts_cands = [t for t in range(1, S + 1)
                if S % t == 0 and (t == S or t % sub == 0)]
    th_cands = [t for t in range(1, H + 1) if H % t == 0]

    def blk_bytes(th, ts):
        return th * ts * D * itemsize

    # Preferred: fuse all heads (gather done once per seq tile), largest seq tile.
    best_ts = None
    for t in ts_cands:
        if blk_bytes(H, t) <= target:
            best_ts = t
    if best_ts is not None and best_ts >= min(256, S):
        th, ts = H, best_ts
    else:
        # Keep the seq tile large and split heads instead of shrinking ts.
        ts = None
        for t in ts_cands:
            if blk_bytes(1, t) <= target and t <= 1024:
                ts = t
        if ts is None:
            ts = ts_cands[0]
        th = 1
        for t in th_cands:
            if blk_bytes(t, ts) <= target:
                th = t

    # v7x megacore: ensure >= 2 grid steps whenever the shape allows it.
    def n_steps(th_, ts_):
        return B * (H // th_) * (S // ts_)

    while n_steps(th, ts) < 2:
        smaller_th = [t for t in th_cands if t < th]
        smaller_ts = [t for t in ts_cands if t < ts]
        if smaller_th:
            th = smaller_th[-1]
        elif smaller_ts:
            ts = smaller_ts[-1]
        else:
            break
    return th, ts


def llama_apply_rotary(x, cos, sin, position_ids, *, seq_tile=None, head_tile=None):
    """x: [B, H, S, D]; cos/sin: [1, 1, max_pos, D]; position_ids: [B, S] int."""
    B, H, S, D = x.shape
    assert D % 2 == 0, "head_dim must be even for rotate_half"
    max_pos = cos.shape[2]
    half = D // 2
    itemsize = jnp.dtype(x.dtype).itemsize

    # Tables in x.dtype (bf16 tables/compute on bf16 models halves table VMEM
    # and VPU work on v6e/v7x); rotate_half sign folded into sin (one-time).
    cos_tab = cos[0, 0].astype(x.dtype)                       # [max_pos, D]
    sin_tab = sin[0, 0]
    sin_signed = jnp.concatenate(
        [-sin_tab[:, :half], sin_tab[:, half:]], axis=-1).astype(x.dtype)

    vmem_cap = _vmem_capacity_bytes()
    th_auto, ts_auto = _choose_tiling(B, H, S, D, itemsize, vmem_cap)
    th = head_tile if head_tile is not None else th_auto
    ts = seq_tile if seq_tile is not None else ts_auto
    assert S % ts == 0 and H % th == 0
    n_s = S // ts

    # Scalar-prefetch data: flattened positions (avoids SMEM row padding) plus
    # per-tile first position and contiguity flag (enables bulk table copy).
    pos = jnp.clip(position_ids.astype(jnp.int32), 0, max_pos - 1)   # bounds safety
    pos_flat = pos.reshape(-1)                                       # [B*S]
    pos_tiles = pos.reshape(B, n_s, ts)
    p0 = pos_tiles[:, :, 0]                                          # [B, n_s]
    expected = p0[:, :, None] + jnp.arange(ts, dtype=jnp.int32)[None, None, :]
    contig = jnp.all(pos_tiles == expected, axis=-1)
    contig = jnp.logical_and(contig, p0 + ts <= max_pos)
    tile_p0 = p0.reshape(-1)
    tile_contig = contig.reshape(-1).astype(jnp.int32)

    # VMEM budget from the actual footprint (in+out double-buffered + tables +
    # scratch) instead of a flat constant; clamped to this chip's capacity.
    blk = th * ts * D * itemsize
    tab = 2 * max_pos * D * itemsize
    scr = 2 * ts * D * itemsize
    footprint = 4 * blk + tab + scr
    vmem_limit = min(vmem_cap, max(footprint + (8 << 20), 16 << 20))

    cost = pl.CostEstimate(
        flops=3 * B * H * S * D,
        transcendentals=0,
        bytes_accessed=2 * B * H * S * D * itemsize + 2 * max_pos * D * itemsize,
    )

    return pl.pallas_call(
        _rope_kernel,
        out_shape=jax.ShapeDtypeStruct((B, H, S, D), x.dtype),
        grid_spec=pltpu.PrefetchScalarGridSpec(
            num_scalar_prefetch=3,
            grid=(B, H // th, S // ts),
            in_specs=[
                pl.BlockSpec((1, th, ts, D),
                             lambda b, hb, si, pos, p0s, cg: (b, hb, si, 0)),
                # Whole tables resident in VMEM, single buffer (no pipelining).
                pl.BlockSpec(memory_space=pltpu.MemorySpace.VMEM),
                pl.BlockSpec(memory_space=pltpu.MemorySpace.VMEM),
            ],
            out_specs=pl.BlockSpec((1, th, ts, D),
                                   lambda b, hb, si, pos, p0s, cg: (b, hb, si, 0)),
            scratch_shapes=[
                pltpu.VMEM((ts, D), x.dtype),
                pltpu.VMEM((ts, D), x.dtype),
            ],
        ),
        compiler_params=pltpu.CompilerParams(
            dimension_semantics=("parallel", "parallel", "parallel"),
            vmem_limit_bytes=int(vmem_limit),
        ),
        cost_estimate=cost,
    )(pos_flat, tile_p0, tile_contig, x, cos_tab, sin_signed)


def _reference(x, cos, sin, position_ids):
    # Pure-JAX reference mirroring the PyTorch forward exactly.
    cos2 = cos[0, 0][position_ids][:, None, :, :]   # [B, 1, S, D]
    sin2 = sin[0, 0][position_ids][:, None, :, :]
    d = x.shape[-1]
    x1 = x[..., : d // 2]
    x2 = x[..., d // 2:]
    rot = jnp.concatenate([-x2, x1], axis=-1)
    return x * cos2 + rot * sin2


def _make_tables(max_pos, D):
    # Deterministic rotary tables (standard Llama construction).
    inv_freq = 1.0 / (10000.0 ** (jnp.arange(0, D, 2, dtype=jnp.float32) / D))
    t = jnp.arange(max_pos, dtype=jnp.float32)
    freqs = jnp.outer(t, inv_freq)                   # [max_pos, D/2]
    emb = jnp.concatenate([freqs, freqs], axis=-1)   # [max_pos, D]
    return jnp.cos(emb)[None, None, :, :], jnp.sin(emb)[None, None, :, :]


if __name__ == "__main__":
    key = jax.random.PRNGKey(0)
    k1, k2, k3 = jax.random.split(key, 3)

    # Case 1: random (non-contiguous) positions -> exercises the gather path.
    B, H, S, D, MAX_POS = 2, 4, 8, 32, 16
    cos, sin = _make_tables(MAX_POS, D)
    x = jax.random.normal(k1, (B, H, S, D), dtype=jnp.float32)
    position_ids = jax.random.randint(k2, (B, S), 0, MAX_POS, dtype=jnp.int32)
    out = llama_apply_rotary(x, cos, sin, position_ids)
    jax.block_until_ready(out)
    ref = _reference(x, cos, sin, position_ids)
    assert out.shape == (B, H, S, D)
    assert jnp.allclose(out, ref, atol=1e-5, rtol=1e-5), "mismatch (gather path)"

    # Case 2: contiguous positions, B=1 -> exercises the bulk-copy fast path
    # and the head-split grid (megacore coverage for decode-like shapes).
    B2 = 1
    x2 = jax.random.normal(k3, (B2, H, S, D), dtype=jnp.float32)
    position_ids2 = (jnp.arange(S, dtype=jnp.int32) + 3)[None, :]
    out2 = llama_apply_rotary(x2, cos, sin, position_ids2)
    jax.block_until_ready(out2)
    ref2 = _reference(x2, cos, sin, position_ids2)
    assert jnp.allclose(out2, ref2, atol=1e-5, rtol=1e-5), "mismatch (bulk path)"

    print("KERNEL_OK")
</pallas_src>

<mosaic_0001>
module attributes {stable_mosaic.version = 11 : i64} {
  func.func @_rope_kernel(%arg0: i32, %arg1: i32, %arg2: i32, %arg3: memref<16xi32, #tpu.memory_space<smem>>, %arg4: memref<2xi32, #tpu.memory_space<smem>>, %arg5: memref<2xi32, #tpu.memory_space<smem>>, %arg6: memref<1x4x8x32xf32, #tpu.memory_space<vmem>>, %arg7: memref<16x32xf32, #tpu.memory_space<vmem>>, %arg8: memref<16x32xf32, #tpu.memory_space<vmem>>, %arg9: memref<1x4x8x32xf32, #tpu.memory_space<vmem>>, %arg10: memref<8x32xf32, #tpu.memory_space<vmem>>, %arg11: memref<8x32xf32, #tpu.memory_space<vmem>>) attributes {dimension_semantics = [#tpu.dimension_semantics<parallel>, #tpu.dimension_semantics<parallel>, #tpu.dimension_semantics<parallel>], iteration_bounds = array<i64: 2, 1, 1>, scalar_prefetch = 3 : i64, scratch_operands = 2 : i64, tpu.core_type = #tpu.core_type<tc>, window_params = [{transform_indices = @transform_0, window_bounds = array<i64: 1, 4, 8, 32>}, {pipeline_mode = #tpu.pipeline_mode<synchronous>, transform_indices = @transform_1, window_bounds = array<i64: 16, 32>}, {pipeline_mode = #tpu.pipeline_mode<synchronous>, transform_indices = @transform_2, window_bounds = array<i64: 16, 32>}, {transform_indices = @transform_3, window_bounds = array<i64: 1, 4, 8, 32>}]} {
    %c1_i32 = arith.constant 1 : i32
    %0 = arith.muli %arg0, %c1_i32 : i32
    %1 = arith.addi %0, %arg2 : i32
    %2 = arith.index_cast %1 : i32 to index
    %3 = memref.load %arg4[%2] : memref<2xi32, #tpu.memory_space<smem>>
    %4 = arith.index_cast %1 : i32 to index
    %5 = memref.load %arg5[%4] : memref<2xi32, #tpu.memory_space<smem>>
    %c1_i32_0 = arith.constant 1 : i32
    %6 = arith.cmpi eq, %5, %c1_i32_0 : i32
    %7 = arith.extui %6 : i1 to i32
    %c0_i32 = arith.constant 0 : i32
    %8 = arith.cmpi ne, %7, %c0_i32 : i32
    scf.if %8 {
      %27 = arith.index_cast %3 : i32 to index
      %c0_14 = arith.constant 0 : index
      %28 = vector.load %arg7[%27, %c0_14] : memref<16x32xf32, #tpu.memory_space<vmem>>, vector<8x32xf32>
      %c0_15 = arith.constant 0 : index
      %c0_16 = arith.constant 0 : index
      %29 = vector.load %arg10[%c0_15, %c0_16] : memref<8x32xf32, #tpu.memory_space<vmem>>, vector<8x32xf32>
      tpu.vector_store %arg10[%c0_15, %c0_16], %28 {strides = array<i32>} : memref<8x32xf32, #tpu.memory_space<vmem>>, vector<8x32xf32>,
      %30 = arith.index_cast %3 : i32 to index
      %c0_17 = arith.constant 0 : index
      %31 = vector.load %arg8[%30, %c0_17] : memref<16x32xf32, #tpu.memory_space<vmem>>, vector<8x32xf32>
      %c0_18 = arith.constant 0 : index
      %c0_19 = arith.constant 0 : index
      %32 = vector.load %arg11[%c0_18, %c0_19] : memref<8x32xf32, #tpu.memory_space<vmem>>, vector<8x32xf32>
      tpu.vector_store %arg11[%c0_18, %c0_19], %31 {strides = array<i32>} : memref<8x32xf32, #tpu.memory_space<vmem>>, vector<8x32xf32>,
    } else {
    }
    %c0_i32_1 = arith.constant 0 : i32
    %9 = arith.cmpi eq, %5, %c0_i32_1 : i32
    %10 = arith.extui %9 : i1 to i32
    %c0_i32_2 = arith.constant 0 : i32
    %11 = arith.cmpi ne, %10, %c0_i32_2 : i32
    scf.if %11 {
      %c8_i32 = arith.constant 8 : i32
      %27 = arith.muli %1, %c8_i32 : i32
      %c0_i32_14 = arith.constant 0 : i32
      %28 = arith.addi %27, %c0_i32_14 : i32
      %29 = arith.index_cast %28 : i32 to index
      %30 = memref.load %arg3[%29] : memref<16xi32, #tpu.memory_space<smem>>
      %31 = arith.index_cast %30 : i32 to index
      %c0_15 = arith.constant 0 : index
      %32 = vector.load %arg7[%31, %c0_15] : memref<16x32xf32, #tpu.memory_space<vmem>>, vector<1x32xf32>
      %33 = arith.index_cast %c0_i32_14 : i32 to index
      %c0_16 = arith.constant 0 : index
      %34 = vector.load %arg10[%33, %c0_16] : memref<8x32xf32, #tpu.memory_space<vmem>>, vector<1x32xf32>
      tpu.vector_store %arg10[%33, %c0_16], %32 {strides = array<i32>} : memref<8x32xf32, #tpu.memory_space<vmem>>, vector<1x32xf32>,
      %35 = arith.index_cast %30 : i32 to index
      %c0_17 = arith.constant 0 : index
      %36 = vector.load %arg8[%35, %c0_17] : memref<16x32xf32, #tpu.memory_space<vmem>>, vector<1x32xf32>
      %37 = arith.index_cast %c0_i32_14 : i32 to index
      %c0_18 = arith.constant 0 : index
      %38 = vector.load %arg11[%37, %c0_18] : memref<8x32xf32, #tpu.memory_space<vmem>>, vector<1x32xf32>
      tpu.vector_store %arg11[%37, %c0_18], %36 {strides = array<i32>} : memref<8x32xf32, #tpu.memory_space<vmem>>, vector<1x32xf32>,
      %c1_i32_19 = arith.constant 1 : i32
      %39 = arith.addi %27, %c1_i32_19 : i32
      %40 = arith.index_cast %39 : i32 to index
      %41 = memref.load %arg3[%40] : memref<16xi32, #tpu.memory_space<smem>>
      %42 = arith.index_cast %41 : i32 to index
      %c0_20 = arith.constant 0 : index
      %43 = vector.load %arg7[%42, %c0_20] : memref<16x32xf32, #tpu.memory_space<vmem>>, vector<1x32xf32>
      %44 = arith.index_cast %c1_i32_19 : i32 to index
      %c0_21 = arith.constant 0 : index
      %45 = vector.load %arg10[%44, %c0_21] : memref<8x32xf32, #tpu.memory_space<vmem>>, vector<1x32xf32>
      tpu.vector_store %arg10[%44, %c0_21], %43 {strides = array<i32>} : memref<8x32xf32, #tpu.memory_space<vmem>>, vector<1x32xf32>,
      %46 = arith.index_cast %41 : i32 to index
      %c0_22 = arith.constant 0 : index
      %47 = vector.load %arg8[%46, %c0_22] : memref<16x32xf32, #tpu.memory_space<vmem>>, vector<1x32xf32>
      %48 = arith.index_cast %c1_i32_19 : i32 to index
      %c0_23 = arith.constant 0 : index
      %49 = vector.load %arg11[%48, %c0_23] : memref<8x32xf32, #tpu.memory_space<vmem>>, vector<1x32xf32>
      tpu.vector_store %arg11[%48, %c0_23], %47 {strides = array<i32>} : memref<8x32xf32, #tpu.memory_space<vmem>>, vector<1x32xf32>,
      %c2_i32 = arith.constant 2 : i32
      %50 = arith.addi %27, %c2_i32 : i32
      %51 = arith.index_cast %50 : i32 to index
      %52 = memref.load %arg3[%51] : memref<16xi32, #tpu.memory_space<smem>>
      %53 = arith.index_cast %52 : i32 to index
      %c0_24 = arith.constant 0 : index
      %54 = vector.load %arg7[%53, %c0_24] : memref<16x32xf32, #tpu.memory_space<vmem>>, vector<1x32xf32>
      %55 = arith.index_cast %c2_i32 : i32 to index
      %c0_25 = arith.constant 0 : index
      %56 = vector.load %arg10[%55, %c0_25] : memref<8x32xf32, #tpu.memory_space<vmem>>, vector<1x32xf32>
      tpu.vector_store %arg10[%55, %c0_25], %54 {strides = array<i32>} : memref<8x32xf32, #tpu.memory_space<vmem>>, vector<1x32xf32>,
      %57 = arith.index_cast %52 : i32 to index
      %c0_26 = arith.constant 0 : index
      %58 = vector.load %arg8[%57, %c0_26] : memref<16x32xf32, #tpu.memory_space<vmem>>, vector<1x32xf32>
      %59 = arith.index_cast %c2_i32 : i32 to index
      %c0_27 = arith.constant 0 : index
      %60 = vector.load %arg11[%59, %c0_27] : memref<8x32xf32, #tpu.memory_space<vmem>>, vector<1x32xf32>
      tpu.vector_store %arg11[%59, %c0_27], %58 {strides = array<i32>} : memref<8x32xf32, #tpu.memory_space<vmem>>, vector<1x32xf32>,
      %c3_i32 = arith.constant 3 : i32
      %61 = arith.addi %27, %c3_i32 : i32
      %62 = arith.index_cast %61 : i32 to index
      %63 = memref.load %arg3[%62] : memref<16xi32, #tpu.memory_space<smem>>
      %64 = arith.index_cast %63 : i32 to index
      %c0_28 = arith.constant 0 : index
      %65 = vector.load %arg7[%64, %c0_28] : memref<16x32xf32, #tpu.memory_space<vmem>>, vector<1x32xf32>
      %66 = arith.index_cast %c3_i32 : i32 to index
      %c0_29 = arith.constant 0 : index
      %67 = vector.load %arg10[%66, %c0_29] : memref<8x32xf32, #tpu.memory_space<vmem>>, vector<1x32xf32>
      tpu.vector_store %arg10[%66, %c0_29], %65 {strides = array<i32>} : memref<8x32xf32, #tpu.memory_space<vmem>>, vector<1x32xf32>,
      %68 = arith.index_cast %63 : i32 to index
      %c0_30 = arith.constant 0 : index
      %69 = vector.load %arg8[%68, %c0_30] : memref<16x32xf32, #tpu.memory_space<vmem>>, vector<1x32xf32>
      %70 = arith.index_cast %c3_i32 : i32 to index
      %c0_31 = arith.constant 0 : index
      %71 = vector.load %arg11[%70, %c0_31] : memref<8x32xf32, #tpu.memory_space<vmem>>, vector<1x32xf32>
      tpu.vector_store %arg11[%70, %c0_31], %69 {strides = array<i32>} : memref<8x32xf32, #tpu.memory_space<vmem>>, vector<1x32xf32>,
      %c4_i32 = arith.constant 4 : i32
      %72 = arith.addi %27, %c4_i32 : i32
      %73 = arith.index_cast %72 : i32 to index
      %74 = memref.load %arg3[%73] : memref<16xi32, #tpu.memory_space<smem>>
      %75 = arith.index_cast %74 : i32 to index
      %c0_32 = arith.constant 0 : index
      %76 = vector.load %arg7[%75, %c0_32] : memref<16x32xf32, #tpu.memory_space<vmem>>, vector<1x32xf32>
      %77 = arith.index_cast %c4_i32 : i32 to index
      %c0_33 = arith.constant 0 : index
      %78 = vector.load %arg10[%77, %c0_33] : memref<8x32xf32, #tpu.memory_space<vmem>>, vector<1x32xf32>
      tpu.vector_store %arg10[%77, %c0_33], %76 {strides = array<i32>} : memref<8x32xf32, #tpu.memory_space<vmem>>, vector<1x32xf32>,
      %79 = arith.index_cast %74 : i32 to index
      %c0_34 = arith.constant 0 : index
      %80 = vector.load %arg8[%79, %c0_34] : memref<16x32xf32, #tpu.memory_space<vmem>>, vector<1x32xf32>
      %81 = arith.index_cast %c4_i32 : i32 to index
      %c0_35 = arith.constant 0 : index
      %82 = vector.load %arg11[%81, %c0_35] : memref<8x32xf32, #tpu.memory_space<vmem>>, vector<1x32xf32>
      tpu.vector_store %arg11[%81, %c0_35], %80 {strides = array<i32>} : memref<8x32xf32, #tpu.memory_space<vmem>>, vector<1x32xf32>,
      %c5_i32 = arith.constant 5 : i32
      %83 = arith.addi %27, %c5_i32 : i32
      %84 = arith.index_cast %83 : i32 to index
      %85 = memref.load %arg3[%84] : memref<16xi32, #tpu.memory_space<smem>>
      %86 = arith.index_cast %85 : i32 to index
      %c0_36 = arith.constant 0 : index
      %87 = vector.load %arg7[%86, %c0_36] : memref<16x32xf32, #tpu.memory_space<vmem>>, vector<1x32xf32>
      %88 = arith.index_cast %c5_i32 : i32 to index
      %c0_37 = arith.constant 0 : index
      %89 = vector.load %arg10[%88, %c0_37] : memref<8x32xf32, #tpu.memory_space<vmem>>, vector<1x32xf32>
      tpu.vector_store %arg10[%88, %c0_37], %87 {strides = array<i32>} : memref<8x32xf32, #tpu.memory_space<vmem>>, vector<1x32xf32>,
      %90 = arith.index_cast %85 : i32 to index
      %c0_38 = arith.constant 0 : index
      %91 = vector.load %arg8[%90, %c0_38] : memref<16x32xf32, #tpu.memory_space<vmem>>, vector<1x32xf32>
      %92 = arith.index_cast %c5_i32 : i32 to index
      %c0_39 = arith.constant 0 : index
      %93 = vector.load %arg11[%92, %c0_39] : memref<8x32xf32, #tpu.memory_space<vmem>>, vector<1x32xf32>
      tpu.vector_store %arg11[%92, %c0_39], %91 {strides = array<i32>} : memref<8x32xf32, #tpu.memory_space<vmem>>, vector<1x32xf32>,
      %c6_i32 = arith.constant 6 : i32
      %94 = arith.addi %27, %c6_i32 : i32
      %95 = arith.index_cast %94 : i32 to index
      %96 = memref.load %arg3[%95] : memref<16xi32, #tpu.memory_space<smem>>
      %97 = arith.index_cast %96 : i32 to index
      %c0_40 = arith.constant 0 : index
      %98 = vector.load %arg7[%97, %c0_40] : memref<16x32xf32, #tpu.memory_space<vmem>>, vector<1x32xf32>
      %99 = arith.index_cast %c6_i32 : i32 to index
      %c0_41 = arith.constant 0 : index
      %100 = vector.load %arg10[%99, %c0_41] : memref<8x32xf32, #tpu.memory_space<vmem>>, vector<1x32xf32>
      tpu.vector_store %arg10[%99, %c0_41], %98 {strides = array<i32>} : memref<8x32xf32, #tpu.memory_space<vmem>>, vector<1x32xf32>,
      %101 = arith.index_cast %96 : i32 to index
      %c0_42 = arith.constant 0 : index
      %102 = vector.load %arg8[%101, %c0_42] : memref<16x32xf32, #tpu.memory_space<vmem>>, vector<1x32xf32>
      %103 = arith.index_cast %c6_i32 : i32 to index
      %c0_43 = arith.constant 0 : index
      %104 = vector.load %arg11[%103, %c0_43] : memref<8x32xf32, #tpu.memory_space<vmem>>, vector<1x32xf32>
      tpu.vector_store %arg11[%103, %c0_43], %102 {strides = array<i32>} : memref<8x32xf32, #tpu.memory_space<vmem>>, vector<1x32xf32>,
      %c7_i32 = arith.constant 7 : i32
      %105 = arith.addi %27, %c7_i32 : i32
      %106 = arith.index_cast %105 : i32 to index
      %107 = memref.load %arg3[%106] : memref<16xi32, #tpu.memory_space<smem>>
      %108 = arith.index_cast %107 : i32 to index
      %c0_44 = arith.constant 0 : index
      %109 = vector.load %arg7[%108, %c0_44] : memref<16x32xf32, #tpu.memory_space<vmem>>, vector<1x32xf32>
      %110 = arith.index_cast %c7_i32 : i32 to index
      %c0_45 = arith.constant 0 : index
      %111 = vector.load %arg10[%110, %c0_45] : memref<8x32xf32, #tpu.memory_space<vmem>>, vector<1x32xf32>
      tpu.vector_store %arg10[%110, %c0_45], %109 {strides = array<i32>} : memref<8x32xf32, #tpu.memory_space<vmem>>, vector<1x32xf32>,
      %112 = arith.index_cast %107 : i32 to index
      %c0_46 = arith.constant 0 : index
      %113 = vector.load %arg8[%112, %c0_46] : memref<16x32xf32, #tpu.memory_space<vmem>>, vector<1x32xf32>
      %114 = arith.index_cast %c7_i32 : i32 to index
      %c0_47 = arith.constant 0 : index
      %115 = vector.load %arg11[%114, %c0_47] : memref<8x32xf32, #tpu.memory_space<vmem>>, vector<1x32xf32>
      tpu.vector_store %arg11[%114, %c0_47], %113 {strides = array<i32>} : memref<8x32xf32, #tpu.memory_space<vmem>>, vector<1x32xf32>,
      %c8_i32_48 = arith.constant 8 : i32
    } else {
    }
    %c0 = arith.constant 0 : index
    %c0_3 = arith.constant 0 : index
    %c0_4 = arith.constant 0 : index
    %c0_5 = arith.constant 0 : index
    %12 = vector.load %arg6[%c0, %c0_3, %c0_4, %c0_5] : memref<1x4x8x32xf32, #tpu.memory_space<vmem>>, vector<1x4x8x32xf32>
    %13 = vector.shape_cast %12 : vector<1x4x8x32xf32> to vector<4x8x32xf32>
    %c0_6 = arith.constant 0 : index
    %c0_7 = arith.constant 0 : index
    %14 = vector.load %arg10[%c0_6, %c0_7] : memref<8x32xf32, #tpu.memory_space<vmem>>, vector<8x32xf32>
    %c0_8 = arith.constant 0 : index
    %c0_9 = arith.constant 0 : index
    %15 = vector.load %arg11[%c0_8, %c0_9] : memref<8x32xf32, #tpu.memory_space<vmem>>, vector<8x32xf32>
    %c16_i32 = arith.constant 16 : i32
    %16 = tpu.dynamic_rotate %13 by %c16_i32 dim 2 : vector<4x8x32xf32>, i32 -> vector<4x8x32xf32>
    %17 = vector.shape_cast %14 : vector<8x32xf32> to vector<1x8x32xf32>
    %18 = vector.broadcast %17 : vector<1x8x32xf32> to vector<4x8x32xf32>
    %19 = arith.mulf %13, %18 : vector<4x8x32xf32>
    %20 = vector.shape_cast %15 : vector<8x32xf32> to vector<1x8x32xf32>
    %21 = vector.broadcast %20 : vector<1x8x32xf32> to vector<4x8x32xf32>
    %22 = arith.mulf %16, %21 : vector<4x8x32xf32>
    %23 = arith.addf %19, %22 : vector<4x8x32xf32>
    %c0_10 = arith.constant 0 : index
    %c0_11 = arith.constant 0 : index
    %c0_12 = arith.constant 0 : index
    %c0_13 = arith.constant 0 : index
    %24 = vector.load %arg9[%c0_10, %c0_11, %c0_12, %c0_13] : memref<1x4x8x32xf32, #tpu.memory_space<vmem>>, vector<1x4x8x32xf32>
    %25 = vector.shape_cast %24 : vector<1x4x8x32xf32> to vector<4x8x32xf32>
    %26 = vector.shape_cast %23 : vector<4x8x32xf32> to vector<1x4x8x32xf32>
    tpu.vector_store %arg9[%c0_10, %c0_11, %c0_12, %c0_13], %26 {strides = array<i32>} : memref<1x4x8x32xf32, #tpu.memory_space<vmem>>, vector<1x4x8x32xf32>,
    return
  }
  func.func @transform_0(%arg0: i32, %arg1: i32, %arg2: i32, %arg3: memref<16xi32, #tpu.memory_space<smem>>, %arg4: memref<2xi32, #tpu.memory_space<smem>>, %arg5: memref<2xi32, #tpu.memory_space<smem>>) -> (i32, i32, i32, i32) {
    %c0_i32 = arith.constant 0 : i32
    %c0_i32_0 = arith.constant 0 : i32
    return %arg0, %arg1, %arg2, %c0_i32 : i32, i32, i32, i32
  }
  func.func @transform_1(%arg0: i32, %arg1: i32, %arg2: i32, %arg3: memref<16xi32, #tpu.memory_space<smem>>, %arg4: memref<2xi32, #tpu.memory_space<smem>>, %arg5: memref<2xi32, #tpu.memory_space<smem>>) -> (i32, i32) {
    %c0_i32 = arith.constant 0 : i32
    %c0_i32_0 = arith.constant 0 : i32
    %c0_i32_1 = arith.constant 0 : i32
    return %c0_i32, %c0_i32_0 : i32, i32
  }
  func.func @transform_2(%arg0: i32, %arg1: i32, %arg2: i32, %arg3: memref<16xi32, #tpu.memory_space<smem>>, %arg4: memref<2xi32, #tpu.memory_space<smem>>, %arg5: memref<2xi32, #tpu.memory_space<smem>>) -> (i32, i32) {
    %c0_i32 = arith.constant 0 : i32
    %c0_i32_0 = arith.constant 0 : i32
    %c0_i32_1 = arith.constant 0 : i32
    return %c0_i32, %c0_i32_0 : i32, i32
  }
  func.func @transform_3(%arg0: i32, %arg1: i32, %arg2: i32, %arg3: memref<16xi32, #tpu.memory_space<smem>>, %arg4: memref<2xi32, #tpu.memory_space<smem>>, %arg5: memref<2xi32, #tpu.memory_space<smem>>) -> (i32, i32, i32, i32) {
    %c0_i32 = arith.constant 0 : i32
    %c0_i32_0 = arith.constant 0 : i32
    return %arg0, %arg1, %arg2, %c0_i32 : i32, i32, i32, i32
  }
}

</mosaic_0001>

<llo_original>
// kernel: tpu_custom_call.1
$region0: #{tpu_custom_call.1}
  #allocation0 [shape = 'u32[]', space=smem, size = 0x4, offset = 0x4, fixed_abs, tag = 'smem constant byte address 0x4 - core index']
  #allocation1 [shape = 'u32[72,128]{1,0:T(1,128)}', space=vmem, size = 0x9000, scoped, tag = 'internal scratch']
  #allocation2 [shape = 'f32[8,32]{1,0:T(8,128)}', space=vmem, size = 0x1000, scoped, tag = 'scratch operand']
  #allocation3 [shape = 'f32[8,32]{1,0:T(8,128)}', space=vmem, size = 0x1000, scoped, tag = 'scratch operand']
  #allocation4 [shape = 's32[1]{0}', space=sflag, size = 0x4, scoped, tag = 'scoped memory for tpu_custom_call.1']
  #allocation5 [shape = 'u8[512]{0}', space=smem, size = 0x200, scoped, tag = 'prefetched SMEM operand 0']
  #allocation6 [shape = 'u8[512]{0}', space=smem, size = 0x200, scoped, tag = 'prefetched SMEM operand 1']
  #allocation7 [shape = 'u8[512]{0}', space=smem, size = 0x200, scoped, tag = 'prefetched SMEM operand 2']
  %s0 = inlined_call_operand.hbm [shape: s32[16], index: 0, kind: input, shape index: {}]
  %s1 = inlined_call_operand.hbm [shape: s32[2], index: 1, kind: input, shape index: {}]
  %s2 = inlined_call_operand.vmem [shape: s32[2], index: 2, kind: input, shape index: {}]
  %s3 = inlined_call_operand.hbm [shape: f32[2,4,8,32], index: 3, kind: input, shape index: {}]
  %s4 = inlined_call_operand.hbm [shape: f32[16,32], index: 4, kind: input, shape index: {}]
  %s5 = inlined_call_operand.hbm [shape: f32[16,32], index: 5, kind: input, shape index: {}]
  %s6 = inlined_call_operand.hbm [shape: f32[2,4,8,32], index: 6, kind: output, shape index: {}]
  %s7 = sld [smem:[#allocation0]]
  $region65: #{tpu_custom_call.1} parent=0
    _
  %s9 = ssub.s32 1, %s7
  %s10 = scalar_select 0, %s9, %s7
  %s12 = sshll.u32 %s0, 4
  %s13 = int_to_ptr.hbm [resolvable:$true] %s12
  %15 = dma.hbm_to_smem %s13, 16, [#allocation5], [#allocation4]
  %s17 = sshll.u32 %s1, 4
  %s18 = int_to_ptr.hbm [resolvable:$true] %s17
  %20 = dma.hbm_to_smem %s18, 16, [#allocation6], [#allocation4]
  %s22 = sshll.u32 %s2, 4
  %s23 = int_to_ptr.vmem [resolvable:$true] %s22
  %25 = dma.vmem_to_smem %s23, 16, [#allocation7], [#allocation4]
  %27 = dma.done [#allocation4], 48
  %28 = sfence
  $region1: #{tpu_custom_call.1} parent=0
    #allocation8 [shape = 'u8[32768]{0}', space=vmem, size = 0x8000, scoped, tag = 'input window, operand 3']
    #allocation9 [shape = 's32[2]{0}', space=sflag, size = 0x8, scoped, tag = 'scoped memory for tpu_custom_call.1']
    #allocation10 [shape = 's32[2]{0}', space=sflag, size = 0x8, scoped, tag = 'scoped memory for tpu_custom_call.1']
    #allocation11 [shape = 'u8[8192]{0}', space=vmem, size = 0x2000, scoped, tag = 'input window, operand 4, single buffered']
    #allocation12 [shape = 's32[1]{0}', space=sflag, size = 0x4, scoped, tag = 'scoped memory for tpu_custom_call.1']
    #allocation13 [shape = 'u8[8192]{0}', space=vmem, size = 0x2000, scoped, tag = 'input window, operand 5, single buffered']
    #allocation14 [shape = 'u8[32768]{0}', space=vmem, size = 0x8000, scoped, tag = 'output window, operand 0']
    %29 = vsyncpa [#allocation9], 0
    %s30 = scalar_lea.sflag [#allocation9], 1
    %31 = vsyncpa %s30, 0
    %32 = vsyncpa [#allocation12], 0
    %33 = vsyncpa [#allocation10], 0
    %s34 = scalar_lea.sflag [#allocation10], 1
    %35 = vsyncpa %s34, 0
    loop: start=0, step=1, limit=4
    $region2: #{tpu_custom_call.1} parent=1 // loop_pre_header
      _
    $region3: #{tpu_custom_call.1} parent=1 // loop_header
      %s37 = sphi 0, %s41
      %p38 = scmp.ge.s32.totalorder %s37, 4
      %s44 = sphi 0, %s63
      %s45 = sphi 0, %s59
      %s46 = sphi 0, %s55
      %s47 = sphi 0, %s44
      %s48 = sphi 0, %s45
      %s49 = sphi 0, %s46
      %s50 = sphi 0, %s47
      %s51 = sphi 0, %s48
      %s52 = sphi 0, %s49
      %s70 = sphi 0, %s72
      %s73 = sphi 0, %s70
      %s74 = sphi 0, %s73
      %s90 = sphi 0, %s74
      %s94 = sphi 0, %s94
      %s96 = sphi 0, %s94
      %s97 = sphi 0, %s96
      %s111 = sphi 0, %s97
      %s115 = sphi 0, %s115
      %s117 = sphi 0, %s115
      %s118 = sphi 0, %s117
      %s132 = sphi 0, %s118
      %s142 = sphi 0, %s144
      %s145 = sphi 0, %s142
      %s146 = sphi 0, %s145
      %s162 = sphi 0, %s146
    $region4: #{tpu_custom_call.1} parent=1 // loop_header_branch
      %40 = sbr.rel (%p38) target = $region8
    $region5: #{tpu_custom_call.1} parent=1 // loop_body
      %s42 = ssub.s32 %s37, 1
      %s43 = ssub.s32 %s37, 2
      %s53 = sadd.s32 1, %s46
      %p54 = scmp.ge.s32.totalorder %s53, 1
      %s55 = scalar_select %p54, 0, %s53
      %s56 = sadd.s32 1, %s45
      %s57 = scalar_select %p54, %s56, %s45
      %p58 = scmp.ge.s32.totalorder %s57, 1
      %s59 = scalar_select %p58, 0, %s57
      %s60 = sadd.s32 1, %s44
      %s61 = scalar_select %p58, %s60, %s44
      %p62 = scmp.ge.s32.totalorder %s61, 2
      %s63 = scalar_select %p62, 0, %s61
      %s64 = ssub.s32 %s44, %s63
      %s65 = ssub.s32 %s45, %s59
      %s66 = sor.u32 %s64, %s65
      %s67 = ssub.s32 %s46, %s55
      %s68 = sor.u32 %s66, %s67
      %p69 = scmp.eq.s32.totalorder %s68, 0
      %s71 = sadd.s32 %s70, 1
      %s72 = scalar_select %p69, %s70, %s71
      %p75 = pneg %p69
      %p76 = scmp.eq.s32.totalorder %s37, 1
      %p77 = por %p75, %p76
      %p78 = scmp.ne.s32.totalorder %s70, %s73
      %p79 = scmp.eq.s32.totalorder %s37, 0
      %p80 = por %p78, %p79
      %p81 = scmp.ne.s32.totalorder %s70, %s73
      %p82 = scmp.eq.s32.totalorder %s42, 1
      %p83 = por %p81, %p82
      %p84 = scmp.ne.s32.totalorder %s73, %s74
      %p85 = scmp.eq.s32.totalorder %s42, 0
      %p86 = por %p84, %p85
      %p87 = scmp.ne.s32.totalorder %s73, %s74
      %p88 = scmp.eq.s32.totalorder %s43, 1
      %p89 = por %p87, %p88
      %p91 = scmp.ne.s32.totalorder %s74, %s90
      %p92 = scmp.eq.s32.totalorder %s43, 0
      %p93 = por %p91, %p92
      %s95 = sadd.s32 %s94, 1
      %p98 = scmp.eq.s32.totalorder %s37, 1
      %p99 = scmp.ne.s32.totalorder %s94, %s96
      %p100 = scmp.eq.s32.totalorder %s37, 0
      %p101 = por %p99, %p100
      %p102 = scmp.ne.s32.totalorder %s94, %s96
      %p103 = scmp.eq.s32.totalorder %s42, 1
      %p104 = por %p102, %p103
      %p105 = scmp.ne.s32.totalorder %s96, %s97
      %p106 = scmp.eq.s32.totalorder %s42, 0
      %p107 = por %p105, %p106
      %p108 = scmp.ne.s32.totalorder %s96, %s97
      %p109 = scmp.eq.s32.totalorder %s43, 1
      %p110 = por %p108, %p109
      %p112 = scmp.ne.s32.totalorder %s97, %s111
      %p113 = scmp.eq.s32.totalorder %s43, 0
      %p114 = por %p112, %p113
      %s116 = sadd.s32 %s115, 1
      %p119 = scmp.eq.s32.totalorder %s37, 1
      %p120 = scmp.ne.s32.totalorder %s115, %s117
      %p121 = scmp.eq.s32.totalorder %s37, 0
      %p122 = por %p120, %p121
      %p123 = scmp.ne.s32.totalorder %s115, %s117
      %p124 = scmp.eq.s32.totalorder %s42, 1
      %p125 = por %p123, %p124
      %p126 = scmp.ne.s32.totalorder %s117, %s118
      %p127 = scmp.eq.s32.totalorder %s42, 0
      %p128 = por %p126, %p127
      %p129 = scmp.ne.s32.totalorder %s117, %s118
      %p130 = scmp.eq.s32.totalorder %s43, 1
      %p131 = por %p129, %p130
      %p133 = scmp.ne.s32.totalorder %s118, %s132
      %p134 = scmp.eq.s32.totalorder %s43, 0
      %p135 = por %p133, %p134
      %s136 = ssub.s32 %s44, %s63
      %s137 = ssub.s32 %s45, %s59
      %s138 = sor.u32 %s136, %s137
      %s139 = ssub.s32 %s46, %s55
      %s140 = sor.u32 %s138, %s139
      %p141 = scmp.eq.s32.totalorder %s140, 0
      %s143 = sadd.s32 %s142, 1
      %s144 = scalar_select %p141, %s142, %s143
      %p147 = pneg %p141
      %p148 = scmp.eq.s32.totalorder %s37, 1
      %p149 = por %p147, %p148
      %p150 = scmp.ne.s32.totalorder %s142, %s145
      %p151 = scmp.eq.s32.totalorder %s37, 0
      %p152 = por %p150, %p151
      %p153 = scmp.ne.s32.totalorder %s142, %s145
      %p154 = scmp.eq.s32.totalorder %s42, 1
      %p155 = por %p153, %p154
      %p156 = scmp.ne.s32.totalorder %s145, %s146
      %p157 = scmp.eq.s32.totalorder %s42, 0
      %p158 = por %p156, %p157
      %p159 = scmp.ne.s32.totalorder %s145, %s146
      %p160 = scmp.eq.s32.totalorder %s43, 1
      %p161 = por %p159, %p160
      %p163 = scmp.ne.s32.totalorder %s146, %s162
      %p164 = scmp.eq.s32.totalorder %s43, 0
      %p165 = por %p163, %p164
      %p166 = scmp.le.s32.totalorder 1, %s37
      %p167 = scmp.lt.s32.totalorder %s37, 3
      %p168 = pnand %p166, %p167
      %p169 = pneg %p168
      // Predicated region
      $region9: #{tpu_custom_call.1} parent=5 // pred_check
        _
      $region10: #{tpu_custom_call.1} parent=5 // pred_check_branch
        %171 = sbr.rel (%p168) target = $region12
      $region11: #{tpu_custom_call.1} parent=5 // pred_region
        %s172 = ssub.s32 %s37, 1
        // Predicated region
        $region13: #{tpu_custom_call.1} parent=11 // pred_check
          %p173 = pneg %p107
        $region14: #{tpu_custom_call.1} parent=11 // pred_check_branch
          %175 = sbr.rel (%p173) target = $region16
        $region15: #{tpu_custom_call.1} parent=11 // pred_region
          %177 = vsyncadd [#allocation12], 0
          %s178 = sshll.u32 %s4, 4
          %s179 = int_to_ptr.hbm [resolvable:$true] %s178
          %s180 = sshll.u32 [#allocation11], 4
          %s181 = int_to_ptr.vmem [resolvable:$true] %s180
          %186 = dma.hbm_to_vmem [thread:$0]  %s179, 256, %s181, [#allocation12], 128, 128, 8
        $region16: #{tpu_custom_call.1} parent=11 // pred_fallthru
          _
        // Predicated region
        $region17: #{tpu_custom_call.1} parent=11 // pred_check
          %p187 = pneg %p128
        $region18: #{tpu_custom_call.1} parent=11 // pred_check_branch
          %189 = sbr.rel (%p187) target = $region20
        $region19: #{tpu_custom_call.1} parent=11 // pred_region
          %191 = vsyncadd [#allocation12], 0
          %s192 = sshll.u32 %s5, 4
          %s193 = int_to_ptr.hbm [resolvable:$true] %s192
          %s194 = sshll.u32 [#allocation13], 4
          %s195 = int_to_ptr.vmem [resolvable:$true] %s194
          %200 = dma.hbm_to_vmem [thread:$0]  %s193, 256, %s195, [#allocation12], 128, 128, 8
        $region20: #{tpu_custom_call.1} parent=11 // pred_fallthru
          _
      $region12: #{tpu_custom_call.1} parent=5 // pred_fallthru
        _
      %p201 = scmp.lt.s32.totalorder %s37, 2
      // Predicated region
      $region21: #{tpu_custom_call.1} parent=5 // pred_check
        %p202 = pneg %p201
      $region22: #{tpu_custom_call.1} parent=5 // pred_check_branch
        %204 = sbr.rel (%p202) target = $region24
      $region23: #{tpu_custom_call.1} parent=5 // pred_region
        // Predicated region
        $region25: #{tpu_custom_call.1} parent=23 // pred_check
          %p205 = pneg %p80
        $region26: #{tpu_custom_call.1} parent=23 // pred_check_branch
          %207 = sbr.rel (%p205) target = $region28
        $region27: #{tpu_custom_call.1} parent=23 // pred_region
          %s208 = sand.u32 %s70, 1
          %s209 = scalar_lea.sflag [#allocation9], %s208
          %s210 = sand.u32 %s70, 1
          %s211 = smul.addr %s210, 32
          %s212 = scalar_lea.vmem [#allocation8], %s211
          %s213 = smul.u32 4, %s45
          %215 = vsyncadd %s209, 0
          %s216 = sadd.s32 %s46, %s213
          %s217 = smul.addr %s44, 4
          %s218 = sadd.s32 %s216, %s217
          %s219 = smul.addr %s218, 8
          %s220 = scalar_lea.hbm %s3, %s219
          %s221 = sshll.u32 %s220, 4
          %s222 = int_to_ptr.hbm [resolvable:$true] %s221
          %s223 = sshll.u32 %s212, 4
          %s224 = int_to_ptr.vmem [resolvable:$true] %s223
          %229 = dma.hbm_to_vmem [thread:$0]  %s222, 512, %s224, %s209, 128, 128, 8
        $region28: #{tpu_custom_call.1} parent=23 // pred_fallthru
          _
      $region24: #{tpu_custom_call.1} parent=5 // pred_fallthru
        _
      %p230 = scmp.le.s32.totalorder 1, %s37
      %p231 = scmp.lt.s32.totalorder %s37, 3
      %p232 = pnand %p230, %p231
      %p233 = pneg %p232
      // Predicated region
      $region29: #{tpu_custom_call.1} parent=5 // pred_check
        _
      $region30: #{tpu_custom_call.1} parent=5 // pred_check_branch
        %235 = sbr.rel (%p232) target = $region32
      $region31: #{tpu_custom_call.1} parent=5 // pred_region
        %s236 = ssub.s32 %s37, 1
        %s237 = sand.u32 %s73, 1
        %s238 = scalar_lea.sflag [#allocation9], %s237
        %s239 = sand.u32 %s73, 1
        %s240 = smul.addr %s239, 32
        %s241 = scalar_lea.vmem [#allocation8], %s240
        // Predicated region
        $region33: #{tpu_custom_call.1} parent=31 // pred_check
          %p242 = pneg %p86
        $region34: #{tpu_custom_call.1} parent=31 // pred_check_branch
          %244 = sbr.rel (%p242) target = $region36
        $region35: #{tpu_custom_call.1} parent=31 // pred_region
          %246 = dma.done %s238, 512
        $region36: #{tpu_custom_call.1} parent=31 // pred_fallthru
          _
        // Predicated region
        $region37: #{tpu_custom_call.1} parent=31 // pred_check
          %p247 = pneg %p107
        $region38: #{tpu_custom_call.1} parent=31 // pred_check_branch
          %249 = sbr.rel (%p247) target = $region40
        $region39: #{tpu_custom_call.1} parent=31 // pred_region
          %251 = dma.done [#allocation12], 256
        $region40: #{tpu_custom_call.1} parent=31 // pred_fallthru
          _
        // Predicated region
        $region41: #{tpu_custom_call.1} parent=31 // pred_check
          %p252 = pneg %p128
        $region42: #{tpu_custom_call.1} parent=31 // pred_check_branch
          %254 = sbr.rel (%p252) target = $region44
        $region43: #{tpu_custom_call.1} parent=31 // pred_region
          %256 = dma.done [#allocation12], 256
        $region44: #{tpu_custom_call.1} parent=31 // pred_fallthru
          _
        %s257 = sand.u32 %s73, 1
        %s258 = scalar_lea.sflag [#allocation9], %s257
        %s259 = sand.u32 %s73, 1
        %s260 = smul.addr %s259, 32
        %s261 = scalar_lea.vmem [#allocation8], %s260
        %p262 = pneg %p86
        %p263 = pneg %p83
        %p264 = pneg %p107
        %p265 = pneg %p104
        %p266 = pneg %p128
        %p267 = pneg %p125
        %p268 = pneg %p158
        %p269 = pneg %p155
        %s270 = sand.u32 %s145, 1
        %s271 = scalar_lea.sflag [#allocation10], %s270
        %s272 = sand.u32 %s145, 1
        %s273 = smul.addr %s272, 32
        %s274 = scalar_lea.vmem [#allocation14], %s273
        %s275 = smul.u32 4, %s48
        %s276 = smul.u32 4, %s48
        %s277 = sadd.s32 %s47, %s49
        %s278 = sld [smem:[#allocation6 + %s277]]
        %s279 = sld [smem:[#allocation7 + %s277]]
        %p280 = scmp.eq.s32.totalorder %s279, 1
        // Predicated region
        $region45: #{tpu_custom_call.1} parent=31 // pred_check
          %p281 = pneg %p280
        $region46: #{tpu_custom_call.1} parent=31 // pred_check_branch
          %283 = sbr.rel (%p281) target = $region48
        $region47: #{tpu_custom_call.1} parent=31 // pred_region
          %s284 = scalar_lea.vmem [#allocation11], %s278
          %v285 = vld [vmem:[%s284] sm:$0xff]
          %vm286 = vcmask 261120
          %287 = vst.msk [vmem:[#allocation2] sm:$0xff] %vm286, %v285
          %s288 = scalar_lea.vmem [#allocation13], %s278
          %v289 = vld [vmem:[%s288] sm:$0xff]
          %290 = vst.msk [vmem:[#allocation3] sm:$0xff] %vm286, %v289
        $region48: #{tpu_custom_call.1} parent=31 // pred_fallthru
          _
        %p291 = scmp.eq.s32.totalorder %s279, 0
        // Predicated region
        $region49: #{tpu_custom_call.1} parent=31 // pred_check
          %p292 = pneg %p291
        $region50: #{tpu_custom_call.1} parent=31 // pred_check_branch
          %294 = sbr.rel (%p292) target = $region52
        $region51: #{tpu_custom_call.1} parent=31 // pred_region
          %s295 = smul.u32 %s277, 8
          %s296 = sld [smem:[#allocation5 + %s295]]
          %s297 = scalar_lea.vmem [#allocation11], %s296
          %v298 = vld [vmem:[%s297] sm:$0x1]
          %vm299 = vcmask 253952
          %300 = vst.msk [vmem:[#allocation2] sm:$0x1] %vm299, %v298
          %s301 = scalar_lea.vmem [#allocation13], %s296
          %v302 = vld [vmem:[%s301] sm:$0x1]
          %303 = vst.msk [vmem:[#allocation3] sm:$0x1] %vm299, %v302
          %s304 = sadd.s32 %s295, 1
          %s305 = sld [smem:[#allocation5 + %s304]]
          %s306 = scalar_lea.vmem [#allocation11], %s305
          %v307 = vld [vmem:[%s306] sm:$0x1]
          %308 = vst.msk [vmem:[#allocation2 + $0x1] sm:$0x1] %vm299, %v307
          %s309 = scalar_lea.vmem [#allocation13], %s305
          %v310 = vld [vmem:[%s309] sm:$0x1]
          %311 = vst.msk [vmem:[#allocation3 + $0x1] sm:$0x1] %vm299, %v310
          %s312 = sadd.s32 %s295, 2
          %s313 = sld [smem:[#allocation5 + %s312]]
          %s314 = scalar_lea.vmem [#allocation11], %s313
          %v315 = vld [vmem:[%s314] sm:$0x1]
          %316 = vst.msk [vmem:[#allocation2 + $0x2] sm:$0x1] %vm299, %v315
          %s317 = scalar_lea.vmem [#allocation13], %s313
          %v318 = vld [vmem:[%s317] sm:$0x1]
          %319 = vst.msk [vmem:[#allocation3 + $0x2] sm:$0x1] %vm299, %v318
          %s320 = sadd.s32 %s295, 3
          %s321 = sld [smem:[#allocation5 + %s320]]
          %s322 = scalar_lea.vmem [#allocation11], %s321
          %v323 = vld [vmem:[%s322] sm:$0x1]
          %324 = vst.msk [vmem:[#allocation2 + $0x3] sm:$0x1] %vm299, %v323
          %s325 = scalar_lea.vmem [#allocation13], %s321
          %v326 = vld [vmem:[%s325] sm:$0x1]
          %327 = vst.msk [vmem:[#allocation3 + $0x3] sm:$0x1] %vm299, %v326
          %s328 = sadd.s32 %s295, 4
          %s329 = sld [smem:[#allocation5 + %s328]]
          %s330 = scalar_lea.vmem [#allocation11], %s329
          %v331 = vld [vmem:[%s330] sm:$0x1]
          %332 = vst.msk [vmem:[#allocation2 + $0x4] sm:$0x1] %vm299, %v331
          %s333 = scalar_lea.vmem [#allocation13], %s329
          %v334 = vld [vmem:[%s333] sm:$0x1]
          %335 = vst.msk [vmem:[#allocation3 + $0x4] sm:$0x1] %vm299, %v334
          %s336 = sadd.s32 %s295, 5
          %s337 = sld [smem:[#allocation5 + %s336]]
          %s338 = scalar_lea.vmem [#allocation11], %s337
          %v339 = vld [vmem:[%s338] sm:$0x1]
          %340 = vst.msk [vmem:[#allocation2 + $0x5] sm:$0x1] %vm299, %v339
          %s341 = scalar_lea.vmem [#allocation13], %s337
          %v342 = vld [vmem:[%s341] sm:$0x1]
          %343 = vst.msk [vmem:[#allocation3 + $0x5] sm:$0x1] %vm299, %v342
          %s344 = sadd.s32 %s295, 6
          %s345 = sld [smem:[#allocation5 + %s344]]
          %s346 = scalar_lea.vmem [#allocation11], %s345
          %v347 = vld [vmem:[%s346] sm:$0x1]
          %348 = vst.msk [vmem:[#allocation2 + $0x6] sm:$0x1] %vm299, %v347
          %s349 = scalar_lea.vmem [#allocation13], %s345
          %v350 = vld [vmem:[%s349] sm:$0x1]
          %351 = vst.msk [vmem:[#allocation3 + $0x6] sm:$0x1] %vm299, %v350
          %s352 = sadd.s32 %s295, 7
          %s353 = sld [smem:[#allocation5 + %s352]]
          %s354 = scalar_lea.vmem [#allocation11], %s353
          %v355 = vld [vmem:[%s354] sm:$0x1]
          %356 = vst.msk [vmem:[#allocation2 + $0x7] sm:$0x1] %vm299, %v355
          %s357 = scalar_lea.vmem [#allocation13], %s353
          %v358 = vld [vmem:[%s357] sm:$0x1]
          %359 = vst.msk [vmem:[#allocation3 + $0x7] sm:$0x1] %vm299, %v358
        $region52: #{tpu_custom_call.1} parent=31 // pred_fallthru
          _
        %v360 = vld [vmem:[%s241] sm:$0xff]
        %v361 = vld [vmem:[%s241 + $0x8] sm:$0xff]
        %v362 = vld [vmem:[%s241 + $0x10] sm:$0xff]
        %v363 = vld [vmem:[%s241 + $0x18] sm:$0xff]
        %v364 = vld [vmem:[#allocation2] sm:$0xff]
        %v365 = vld [vmem:[#allocation3] sm:$0xff]
        %vm366 = vcmask 1047808
        %367 = vrot.lane.b32.xlu0 %v360, 32
        %v368 = vpop.permute.xlu0 %367
        %v369 = vsel %vm366, %v368, %v360
        %370 = vrot.lane.b32.xlu0 %v361, 32
        %v371 = vpop.permute.xlu0 %370
        %v372 = vsel %vm366, %v371, %v361
        %373 = vrot.lane.b32.xlu0 %v362, 32
        %v374 = vpop.permute.xlu0 %373
        %v375 = vsel %vm366, %v374, %v362
        %376 = vrot.lane.b32.xlu0 %v363, 32
        %v377 = vpop.permute.xlu0 %376
        %v378 = vsel %vm366, %v377, %v363
        %379 = vrot.lane.b32.xlu0 %v369, 32
        %v380 = vpop.permute.xlu0 %379
        %381 = vrot.lane.b32.xlu0 %v372, 32
        %v382 = vpop.permute.xlu0 %381
        %383 = vrot.lane.b32.xlu0 %v375, 32
        %v384 = vpop.permute.xlu0 %383
        %385 = vrot.lane.b32.xlu0 %v378, 32
        %v386 = vpop.permute.xlu0 %385
        %v387 = vsel %vm366, %v380, %v360
        %v388 = vsel %vm366, %v382, %v361
        %v389 = vsel %vm366, %v384, %v362
        %v390 = vsel %vm366, %v386, %v363
        %v391 = vmul.f32 %v360, %v364
        %v392 = vmul.f32 %v361, %v364
        %v393 = vmul.f32 %v362, %v364
        %v394 = vmul.f32 %v363, %v364
        %396 = vrot.lane.b32.xlu0 %v365, 16
        %v397 = vpop.permute.xlu0 %396
        %v399 = vmul.f32 %v387, %v397
        %v400 = vmul.f32 %v388, %v397
        %v401 = vmul.f32 %v389, %v397
        %v402 = vmul.f32 %v390, %v397
        %407 = vrot.lane.b32.xlu0 %v399, 112
        %v408 = vpop.permute.xlu0 %407
        %409 = vrot.lane.b32.xlu0 %v400, 112
        %v410 = vpop.permute.xlu0 %409
        %411 = vrot.lane.b32.xlu0 %v401, 112
        %v412 = vpop.permute.xlu0 %411
        %413 = vrot.lane.b32.xlu0 %v402, 112
        %v414 = vpop.permute.xlu0 %413
        %v419 = vadd.f32 %v391, %v408
        %v420 = vadd.f32 %v392, %v410
        %v421 = vadd.f32 %v393, %v412
        %v422 = vadd.f32 %v394, %v414
        %vm423 = vcmask 261120
        %424 = vst.msk [vmem:[%s274] sm:$0xff] %vm423, %v419
        %425 = vst.msk [vmem:[%s274 + $0x8] sm:$0xff] %vm423, %v420
        %426 = vst.msk [vmem:[%s274 + $0x10] sm:$0xff] %vm423, %v421
        %427 = vst.msk [vmem:[%s274 + $0x18] sm:$0xff] %vm423, %v422
        %s428 = sand.u32 %s145, 1
        %s429 = scalar_lea.sflag [#allocation10], %s428
        %s430 = sand.u32 %s145, 1
        %s431 = smul.addr %s430, 32
        %s432 = scalar_lea.vmem [#allocation14], %s431
        // Predicated region
        $region53: #{tpu_custom_call.1} parent=31 // pred_check
          %p433 = pneg %p155
        $region54: #{tpu_custom_call.1} parent=31 // pred_check_branch
          %435 = sbr.rel (%p433) target = $region56
        $region55: #{tpu_custom_call.1} parent=31 // pred_region
          %s436 = smul.u32 4, %s48
          %438 = vsyncadd %s429, 0
          %s439 = sadd.s32 %s49, %s436
          %s440 = smul.addr %s47, 4
          %s441 = sadd.s32 %s439, %s440
          %s442 = smul.addr %s441, 8
          %s443 = scalar_lea.hbm %s6, %s442
          %s444 = sshll.u32 %s432, 4
          %s445 = int_to_ptr.vmem [resolvable:$true] %s444
          %s446 = sshll.u32 %s443, 4
          %s447 = int_to_ptr.hbm [resolvable:$true] %s446
          %452 = dma.vmem_to_hbm [thread:$0]  %s445, 512, %s447, %s429, 128, 128, 8
        $region56: #{tpu_custom_call.1} parent=31 // pred_fallthru
          _
      $region32: #{tpu_custom_call.1} parent=5 // pred_fallthru
        _
      %p453 = scmp.le.s32.totalorder 2, %s37
      // Predicated region
      $region57: #{tpu_custom_call.1} parent=5 // pred_check
        %p454 = pneg %p453
      $region58: #{tpu_custom_call.1} parent=5 // pred_check_branch
        %456 = sbr.rel (%p454) target = $region60
      $region59: #{tpu_custom_call.1} parent=5 // pred_region
        %s457 = ssub.s32 %s37, 2
        // Predicated region
        $region61: #{tpu_custom_call.1} parent=59 // pred_check
          %p458 = pneg %p161
        $region62: #{tpu_custom_call.1} parent=59 // pred_check_branch
          %460 = sbr.rel (%p458) target = $region64
        $region63: #{tpu_custom_call.1} parent=59 // pred_region
          %s461 = sand.u32 %s146, 1
          %s462 = scalar_lea.sflag [#allocation10], %s461
          %s463 = sand.u32 %s146, 1
          %s464 = smul.addr %s463, 32
          %s465 = scalar_lea.vmem [#allocation14], %s464
          %467 = dma.done %s462, 512
        $region64: #{tpu_custom_call.1} parent=59 // pred_fallthru
          _
      $region60: #{tpu_custom_call.1} parent=5 // pred_fallthru
        _
    $region6: #{tpu_custom_call.1} parent=1 // loop_footer
      %s41 = sadd.s32 1, %s37
    $region7: #{tpu_custom_call.1} parent=1 // loop_footer_branch
      %36 = sbr.rel target = $region3
    $region8: #{tpu_custom_call.1} parent=1 // loop_exit
      _
    %468 = vsyncpa [#allocation9], 1
    %s469 = scalar_lea.sflag [#allocation9], 1
    %470 = vsyncpa %s469, 1
    %471 = vsyncpa [#allocation12], 1
    %472 = vsyncpa [#allocation10], 1
    %s473 = scalar_lea.sflag [#allocation10], 1
    %474 = vsyncpa %s473, 1

</llo_original>
